<compile_context>
chip_gen: v6e
topology: v6e:2x2x1
jax: 0.10.0
libtpu: 0.0.40
codegen_flags: <defaults>
</compile_context>

<pallas_src>
import functools

import jax
import jax.numpy as jnp
from jax.experimental import pallas as pl
from jax.experimental.pallas import tpu as pltpu


def _vmem_limit_bytes():
    # v5e/v6e have 128 MiB VMEM per TensorCore, v7x only 64 MiB.  Request at most 3/4
    # of physical (capped at 64 MiB) to leave headroom for double-buffers and the
    # compiler's internal scratch.
    try:
        cap = int(pltpu.get_tpu_info().vmem_capacity_bytes)
    except Exception:
        cap = 128 * 1024 * 1024
    return int(min(64 * 1024 * 1024, cap * 3 // 4))


# ----------------------------------------------------------------------------
# 1) Fused QKV projection with the head/kind permute folded into the kernel
# ----------------------------------------------------------------------------
def _qkv_linear_kernel(x_ref, w_ref, b_ref, o_ref, *, n_heads, dim_head):
    # x: (bm, E), w: (E, 3*H*K) compute dtype, b: (1, 3*H*K) f32 -> o: (3, H, bm, K).
    x = x_ref[...].astype(w_ref.dtype)                    # in-kernel cast (no HBM pass)
    acc = jnp.dot(x, w_ref[...], preferred_element_type=jnp.float32)
    acc = acc + b_ref[...]
    # Columns are ordered (kind, head, k); scatter them into the (kind, head, bm, k)
    # output tile with static lane slices (rides VPU/XLU, overlaps the next MXU tile).
    for s in range(3):
        for h in range(n_heads):
            c = (s * n_heads + h) * dim_head
            o_ref[s, h] = acc[:, c:c + dim_head].astype(o_ref.dtype)


def pallas_qkv_proj(x, w, b2d, *, n_heads, dim_head, block_m=512):
    """x: (M, E), w: (E, 3*H*K), b2d: (1, 3*H*K).  Returns (3, H, M, K) in w.dtype."""
    M, E = x.shape
    N = w.shape[1]
    bm = min(block_m, M)
    kernel = functools.partial(_qkv_linear_kernel, n_heads=n_heads, dim_head=dim_head)
    return pl.pallas_call(
        kernel,
        out_shape=jax.ShapeDtypeStruct((3, n_heads, M, dim_head), w.dtype),
        grid=(pl.cdiv(M, bm),),
        in_specs=[
            pl.BlockSpec((bm, E), lambda i: (i, 0)),
            pl.BlockSpec((E, N), lambda i: (0, 0)),    # constant block -> fetched once
            pl.BlockSpec((1, N), lambda i: (0, 0)),
        ],
        out_specs=pl.BlockSpec((3, n_heads, bm, dim_head), lambda i: (0, 0, i, 0)),
        compiler_params=pltpu.CompilerParams(
            dimension_semantics=("parallel",),
            vmem_limit_bytes=_vmem_limit_bytes()),
    )(x, w, b2d)


# ----------------------------------------------------------------------------
# 2) Cross-modal attention core (batched over a block of the batch axis)
# ----------------------------------------------------------------------------
def _mmattn_kernel(qkv_t_ref, qkv_l_ref, at_ref, al_ref, ctx_ref):
    # qkv_*_ref: (3, 1, bsz, T, K) -> q/k/v tiles for the current (head, batch-block).
    qt = qkv_t_ref[0, 0]
    kt = qkv_t_ref[1, 0]
    vt = qkv_t_ref[2, 0]
    ql = qkv_l_ref[0, 0]
    kl = qkv_l_ref[1, 0]
    vl = qkv_l_ref[2, 0]

    # Softmax scale is already folded into the Q projection; contract the last dims
    # directly (no K transpose on the XLU), batched over bsz, f32 MXU accumulation.
    attn_t = jnp.einsum("bqk,btk->bqt", qt, kt, preferred_element_type=jnp.float32)
    attn_l = jnp.einsum("bqk,btk->bqt", ql, kl, preferred_element_type=jnp.float32)

    # Both modalities share the same summed logits -> one softmax (dropout = 0).
    logits = attn_t + attn_l
    m = jnp.max(logits, axis=-1, keepdims=True)
    p = jnp.exp(logits - m)
    p = p * pl.reciprocal(jnp.sum(p, axis=-1, keepdims=True), approx=True)

    # Single fused P @ [Vt | Vl] matmul -> one lane-dense (bsz, T, 2K) store.
    v_cat = jnp.concatenate([vt, vl], axis=-1)
    ctx = jnp.einsum("bqt,btk->bqk", p.astype(v_cat.dtype), v_cat,
                     preferred_element_type=jnp.float32)

    at_ref[0] = attn_t.astype(at_ref.dtype)
    al_ref[0] = attn_l.astype(al_ref.dtype)
    ctx_ref[0] = ctx.astype(ctx_ref.dtype)


def _pick_batch_block(B, T, K, qkv_bytes, attn_bytes, ctx_bytes,
                      budget_bytes=24 * 1024 * 1024):
    """Largest divisor of B whose per-step VMEM footprint fits the budget."""
    per_b = (4 * T * T * 4                        # f32 logits / probs intermediates
             + 2 * 2 * T * T * attn_bytes         # double-buffered attn_t/attn_l tiles
             + 2 * T * 2 * K * ctx_bytes          # double-buffered ctx tile
             + 2 * 2 * 3 * T * K * qkv_bytes)     # double-buffered qkv_t/qkv_l tiles
    cap = max(1, min(B, budget_bytes // max(per_b, 1)))
    return max(d for d in range(1, cap + 1) if B % d == 0)


def pallas_mm_attention(qkv_t, qkv_l, *, attn_dtype):
    """qkv_*: (3, H, B, T, K).  Returns attn_t, attn_l: (H,B,T,T), ctx: (H,B,T,2K)."""
    _, H, B, T, K = qkv_t.shape
    cdt = qkv_t.dtype
    bsz = _pick_batch_block(
        B, T, K,
        qkv_bytes=jnp.dtype(cdt).itemsize,
        attn_bytes=jnp.dtype(attn_dtype).itemsize,
        ctx_bytes=jnp.dtype(cdt).itemsize)

    qkv_spec = pl.BlockSpec((3, 1, bsz, T, K), lambda h, b: (0, h, b, 0, 0))
    attn_spec = pl.BlockSpec((1, bsz, T, T), lambda h, b: (h, b, 0, 0))
    ctx_spec = pl.BlockSpec((1, bsz, T, 2 * K), lambda h, b: (h, b, 0, 0))

    # TODO(synk): for very long T on v7x (64 MiB VMEM), add a KV grid axis marked
    # "arbitrary" with online-softmax m/l/acc scratch and stream (T, tk) attention-map
    # tiles instead of holding full (T, T) intermediates.
    return pl.pallas_call(
        _mmattn_kernel,
        out_shape=(
            jax.ShapeDtypeStruct((H, B, T, T), attn_dtype),      # attn_t (pre-softmax)
            jax.ShapeDtypeStruct((H, B, T, T), attn_dtype),      # attn_l
            jax.ShapeDtypeStruct((H, B, T, 2 * K), cdt),         # [text | layout] ctx
        ),
        grid=(H, B // bsz),
        in_specs=[qkv_spec, qkv_spec],
        out_specs=(attn_spec, attn_spec, ctx_spec),
        compiler_params=pltpu.CompilerParams(
            dimension_semantics=("parallel", "parallel"),
            vmem_limit_bytes=_vmem_limit_bytes()),
    )(qkv_t, qkv_l)


# ----------------------------------------------------------------------------
# 3) Fused output projections (head merge as reduction axis, streamed weights)
# ----------------------------------------------------------------------------
def _out_proj_kernel(ctx_ref, wt_ref, wl_ref, bt_ref, bl_ref, ot_ref, ol_ref,
                     acc_t, acc_l):
    # ctx_ref: (1, bm, 2K) tile of head h; wt/wl_ref: (1, K, E) streamed per head.
    h = pl.program_id(1)
    K = wt_ref.shape[1]

    @pl.when(h == 0)
    def _():
        acc_t[...] = jnp.zeros_like(acc_t)
        acc_l[...] = jnp.zeros_like(acc_l)

    x = ctx_ref[0]                                    # (bm, 2K)
    # TODO(synk): x[:, K:] starts at a non-128-lane offset when K < 128 (minor lane
    # shuffle); pad each half to 128 lanes to remove it entirely.
    acc_t[...] += jnp.dot(x[:, :K], wt_ref[0], preferred_element_type=jnp.float32)
    acc_l[...] += jnp.dot(x[:, K:], wl_ref[0], preferred_element_type=jnp.float32)

    @pl.when(h == pl.num_programs(1) - 1)
    def _():
        ot_ref[...] = (acc_t[...] + bt_ref[...]).astype(ot_ref.dtype)
        ol_ref[...] = (acc_l[...] + bl_ref[...]).astype(ol_ref.dtype)


def pallas_out_proj(ctx, w_t, w_l, b_t, b_l, *, out_dtype, block_m=512):
    """ctx: (H, M, 2K) per-head [text|layout] context.  w_*: (H, K, E), b_*: (1, E) f32.
    Returns (text_out, layout_out), each (M, E) = sum_h ctx[h, :, half] @ w[h] + b."""
    H, M, K2 = ctx.shape
    K = K2 // 2
    E = w_t.shape[-1]
    bm = min(block_m, M)

    return pl.pallas_call(
        _out_proj_kernel,
        out_shape=(jax.ShapeDtypeStruct((M, E), out_dtype),
                   jax.ShapeDtypeStruct((M, E), out_dtype)),
        grid=(pl.cdiv(M, bm), H),                     # heads innermost = reduction axis
        in_specs=[
            pl.BlockSpec((1, bm, K2), lambda i, h: (h, i, 0)),
            pl.BlockSpec((1, K, E), lambda i, h: (h, 0, 0)),   # per-head streamed weight
            pl.BlockSpec((1, K, E), lambda i, h: (h, 0, 0)),
            pl.BlockSpec((1, E), lambda i, h: (0, 0)),
            pl.BlockSpec((1, E), lambda i, h: (0, 0)),
        ],
        out_specs=(pl.BlockSpec((bm, E), lambda i, h: (i, 0)),
                   pl.BlockSpec((bm, E), lambda i, h: (i, 0))),
        scratch_shapes=[pltpu.VMEM((bm, E), jnp.float32),
                        pltpu.VMEM((bm, E), jnp.float32)],
        compiler_params=pltpu.CompilerParams(
            dimension_semantics=("parallel", "arbitrary"),
            vmem_limit_bytes=_vmem_limit_bytes()),
    )(ctx, w_t, w_l, b_t, b_l)


# ----------------------------------------------------------------------------
# Parameters
# ----------------------------------------------------------------------------
def init_params(key, embed_dim, inner_dim, dtype=jnp.float32):
    """PyTorch-layout parameters: Linear weight (out_features, in_features), bias (out,)."""
    names = ["text_q", "text_k", "text_v", "layout_q", "layout_k", "layout_v",
             "out_t", "out_l"]
    params = {}
    keys = jax.random.split(key, 2 * len(names))
    for i, name in enumerate(names):
        if name.startswith("out"):
            shape_w, shape_b = (embed_dim, inner_dim), (embed_dim,)
        else:
            shape_w, shape_b = (inner_dim, embed_dim), (inner_dim,)
        params["w_" + name] = (0.02 * jax.random.normal(keys[2 * i], shape_w)).astype(dtype)
        params["b_" + name] = (0.02 * jax.random.normal(keys[2 * i + 1], shape_b)).astype(dtype)
    return params


def prepare_params(params, n_heads, dim_head, embed_dim, *, compute_dtype=jnp.bfloat16):
    """One-time re-layout of PyTorch-style params into fused, kernel-friendly layouts.
    The softmax scale is folded into the Q projection; matmul weights are cast to
    `compute_dtype` (bf16 by default for MXU throughput), biases stay f32."""
    inner = n_heads * dim_head
    scale = dim_head ** (-0.5)

    def fuse_qkv(prefix):
        wq = params[f"w_{prefix}_q"] * scale            # fold scale into Q (free)
        bq = params[f"b_{prefix}_q"] * scale
        w = jnp.concatenate([wq, params[f"w_{prefix}_k"], params[f"w_{prefix}_v"]],
                            axis=0)                     # (3*inner, E)
        b = jnp.concatenate([bq, params[f"b_{prefix}_k"], params[f"b_{prefix}_v"]],
                            axis=0)
        return (jnp.asarray(w.T, dtype=compute_dtype),             # (E, 3*inner)
                b.reshape(1, 3 * inner).astype(jnp.float32))

    def prep_out(name):
        w = params[f"w_{name}"].T.reshape(n_heads, dim_head, embed_dim)  # (H, K, E)
        b = params[f"b_{name}"].reshape(1, embed_dim)
        return jnp.asarray(w, dtype=compute_dtype), b.astype(jnp.float32)

    w_qkv_t, b_qkv_t = fuse_qkv("text")
    w_qkv_l, b_qkv_l = fuse_qkv("layout")
    w_out_t, b_out_t = prep_out("out_t")
    w_out_l, b_out_l = prep_out("out_l")
    return dict(w_qkv_t=w_qkv_t, b_qkv_t=b_qkv_t,
                w_qkv_l=w_qkv_l, b_qkv_l=b_qkv_l,
                w_out_t=w_out_t, b_out_t=b_out_t,
                w_out_l=w_out_l, b_out_l=b_out_l)


# ----------------------------------------------------------------------------
# Module wrapper
# ----------------------------------------------------------------------------
def multimodal_attention_layer(text_feature, layout_feature, fused, n_heads, dim_head,
                               *, attn_dtype=None):
    """Forward pass matching MultiModalAttentionLayer.forward (dropout=0).
    attn_dtype: storage dtype of the returned pre-softmax attention maps; defaults to
    the compute dtype (bf16 in the perf path) to halve the T^2 HBM writeback."""
    B, T, E = text_feature.shape
    K = dim_head
    M = B * T
    act_dt = text_feature.dtype
    cdt = fused["w_qkv_t"].dtype
    if attn_dtype is None:
        attn_dtype = cdt

    # Fused QKV projections: 2 tiled MXU matmuls instead of 6; the head/kind permute is
    # done on the VMEM tile, so no XLA transpose / HBM round trip of QKV.
    qkv_t = pallas_qkv_proj(text_feature.reshape(M, E), fused["w_qkv_t"],
                            fused["b_qkv_t"], n_heads=n_heads, dim_head=K)
    qkv_l = pallas_qkv_proj(layout_feature.reshape(M, E), fused["w_qkv_l"],
                            fused["b_qkv_l"], n_heads=n_heads, dim_head=K)

    # (3, H, M, K) -> (3, H, B, T, K): free reshape (M = B*T, adjacent dims).
    qkv_t = qkv_t.reshape(3, n_heads, B, T, K)
    qkv_l = qkv_l.reshape(3, n_heads, B, T, K)

    attn_t, attn_l, ctx_cat = pallas_mm_attention(qkv_t, qkv_l, attn_dtype=attn_dtype)

    # ctx_cat: (H, B, T, 2K) -> (H, M, 2K) free reshape; the head merge
    # 'h b l k -> b l (h k)' is folded into the output-projection reduction axis.
    ctx_flat = ctx_cat.reshape(n_heads, M, 2 * K)
    text_context, layout_context = pallas_out_proj(
        ctx_flat, fused["w_out_t"], fused["w_out_l"],
        fused["b_out_t"], fused["b_out_l"], out_dtype=act_dt)

    return {
        "layout_feature": layout_context.reshape(B, T, E),
        "text_feature": text_context.reshape(B, T, E),
        "layout_attention": attn_l,
        "textual_attention": attn_t,
    }


# ----------------------------------------------------------------------------
# Pure-JAX reference (for a correctness sanity check)
# ----------------------------------------------------------------------------
def reference_forward(text_feature, layout_feature, params, n_heads, dim_head):
    B, T, E = text_feature.shape
    inner = n_heads * dim_head
    scale = dim_head ** (-0.5)

    with jax.default_matmul_precision("float32"):
        def lin(x, name):
            return x @ params["w_" + name].T + params["b_" + name]

        def to_heads(y):
            return y.reshape(B, T, n_heads, dim_head).transpose(2, 0, 1, 3)

        q_t, k_t, v_t = (to_heads(lin(text_feature, n))
                         for n in ("text_q", "text_k", "text_v"))
        q_l, k_l, v_l = (to_heads(lin(layout_feature, n))
                         for n in ("layout_q", "layout_k", "layout_v"))

        attn_t = jnp.einsum("hblk,hbtk->hblt", q_t, k_t) * scale
        attn_l = jnp.einsum("hblk,hbtk->hblt", q_l, k_l) * scale
        probs = jax.nn.softmax(attn_t + attn_l, axis=-1)
        ctx_t = jnp.einsum("hblt,hbtv->hblv", probs, v_t).transpose(1, 2, 0, 3)
        ctx_l = jnp.einsum("hblt,hbtv->hblv", probs, v_l).transpose(1, 2, 0, 3)
        ctx_t = ctx_t.reshape(B, T, inner)
        ctx_l = ctx_l.reshape(B, T, inner)
        return {
            "layout_feature": ctx_l @ params["w_out_l"].T + params["b_out_l"],
            "text_feature": ctx_t @ params["w_out_t"].T + params["b_out_t"],
            "layout_attention": attn_l,
            "textual_attention": attn_t,
        }


if __name__ == "__main__":
    # Small shapes consistent with the module: (B, T, embed_dim), inner = heads*dim_head
    B, T = 2, 8
    embed_dim, n_heads, dim_head = 32, 2, 16
    inner_dim = n_heads * dim_head

    key = jax.random.PRNGKey(0)
    k_params, k_text, k_layout = jax.random.split(key, 3)
    params = init_params(k_params, embed_dim, inner_dim)
    text_feature = jax.random.normal(k_text, (B, T, embed_dim), dtype=jnp.float32)
    layout_feature = jax.random.normal(k_layout, (B, T, embed_dim), dtype=jnp.float32)

    ref = reference_forward(text_feature, layout_feature, params, n_heads, dim_head)

    # --- exact-parity path (f32 MXU operands, f32 accumulation) -----------------
    fused_f32 = prepare_params(params, n_heads, dim_head, embed_dim,
                               compute_dtype=jnp.float32)
    out = multimodal_attention_layer(text_feature, layout_feature, fused_f32,
                                     n_heads, dim_head)
    out = jax.tree_util.tree_map(jax.block_until_ready, out)
    tol = {"layout_feature": 3e-3, "text_feature": 3e-3,
           "layout_attention": 1e-4, "textual_attention": 1e-4}
    for name in out:
        assert out[name].shape == ref[name].shape, name
        err = float(jnp.max(jnp.abs(out[name].astype(jnp.float32) - ref[name])))
        assert err < tol[name], f"f32 {name}: max abs err {err}"

    # --- performance path (bf16 MXU operands, f32 accumulation) -----------------
    fused_bf16 = prepare_params(params, n_heads, dim_head, embed_dim,
                                compute_dtype=jnp.bfloat16)
    out16 = multimodal_attention_layer(text_feature, layout_feature, fused_bf16,
                                       n_heads, dim_head)
    out16 = jax.tree_util.tree_map(jax.block_until_ready, out16)
    for name in out16:
        assert out16[name].shape == ref[name].shape, name
        err = float(jnp.max(jnp.abs(out16[name].astype(jnp.float32) - ref[name])))
        assert err < 5e-2, f"bf16 {name}: max abs err {err}"

    print("KERNEL_OK")
</pallas_src>

<mosaic_0001>
module attributes {stable_mosaic.version = 11 : i64} {
  func.func @_qkv_linear_kernel(%arg0: i32, %arg1: memref<16x32xf32, #tpu.memory_space<vmem>>, %arg2: memref<32x96xf32, #tpu.memory_space<vmem>>, %arg3: memref<1x96xf32, #tpu.memory_space<vmem>>, %arg4: memref<3x2x16x16xf32, #tpu.memory_space<vmem>>) attributes {dimension_semantics = [#tpu.dimension_semantics<parallel>], iteration_bounds = array<i64: 1>, scalar_prefetch = 0 : i64, scratch_operands = 0 : i64, tpu.core_type = #tpu.core_type<tc>, window_params = [{transform_indices = @transform_0, window_bounds = array<i64: 16, 32>}, {pipeline_mode = #tpu.pipeline_mode<synchronous>, transform_indices = @transform_1, window_bounds = array<i64: 32, 96>}, {pipeline_mode = #tpu.pipeline_mode<synchronous>, transform_indices = @transform_2, window_bounds = array<i64: 1, 96>}, {transform_indices = @transform_3, window_bounds = array<i64: 3, 2, 16, 16>}]} {
    %c0 = arith.constant 0 : index
    %c0_0 = arith.constant 0 : index
    %0 = vector.load %arg1[%c0, %c0_0] : memref<16x32xf32, #tpu.memory_space<vmem>>, vector<16x32xf32>
    %c0_1 = arith.constant 0 : index
    %c0_2 = arith.constant 0 : index
    %1 = vector.load %arg2[%c0_1, %c0_2] : memref<32x96xf32, #tpu.memory_space<vmem>>, vector<32x96xf32>
    %cst = arith.constant dense<0.000000e+00> : vector<16x96xf32>
    %2 = tpu.matmul %0, %1, %cst {dimension_numbers = #tpu.dot_dimension_numbers<[1], [0], [0], [1], [0, 0, 1, 1], [], []>} : vector<16x32xf32>, vector<32x96xf32>, vector<16x96xf32> -> vector<16x96xf32>
    %c0_3 = arith.constant 0 : index
    %c0_4 = arith.constant 0 : index
    %3 = vector.load %arg3[%c0_3, %c0_4] : memref<1x96xf32, #tpu.memory_space<vmem>>, vector<1x96xf32>
    %4 = vector.broadcast %3 : vector<1x96xf32> to vector<16x96xf32>
    %5 = arith.addf %2, %4 : vector<16x96xf32>
    %6 = vector.extract_strided_slice %5 {offsets = [0, 0], sizes = [16, 16], strides = [1, 1]} : vector<16x96xf32> to vector<16x16xf32>
    %c0_5 = arith.constant 0 : index
    %c0_6 = arith.constant 0 : index
    %c0_7 = arith.constant 0 : index
    %c0_8 = arith.constant 0 : index
    %7 = vector.load %arg4[%c0_5, %c0_6, %c0_7, %c0_8] : memref<3x2x16x16xf32, #tpu.memory_space<vmem>>, vector<1x1x16x16xf32>
    %8 = vector.shape_cast %7 : vector<1x1x16x16xf32> to vector<16x16xf32>
    %9 = vector.shape_cast %6 : vector<16x16xf32> to vector<1x1x16x16xf32>
    tpu.vector_store %arg4[%c0_5, %c0_6, %c0_7, %c0_8], %9 {strides = array<i32>} : memref<3x2x16x16xf32, #tpu.memory_space<vmem>>, vector<1x1x16x16xf32>,
    %10 = vector.extract_strided_slice %5 {offsets = [0, 16], sizes = [16, 16], strides = [1, 1]} : vector<16x96xf32> to vector<16x16xf32>
    %c0_9 = arith.constant 0 : index
    %c1 = arith.constant 1 : index
    %c0_10 = arith.constant 0 : index
    %c0_11 = arith.constant 0 : index
    %11 = vector.load %arg4[%c0_9, %c1, %c0_10, %c0_11] : memref<3x2x16x16xf32, #tpu.memory_space<vmem>>, vector<1x1x16x16xf32>
    %12 = vector.shape_cast %11 : vector<1x1x16x16xf32> to vector<16x16xf32>
    %13 = vector.shape_cast %10 : vector<16x16xf32> to vector<1x1x16x16xf32>
    tpu.vector_store %arg4[%c0_9, %c1, %c0_10, %c0_11], %13 {strides = array<i32>} : memref<3x2x16x16xf32, #tpu.memory_space<vmem>>, vector<1x1x16x16xf32>,
    %14 = vector.extract_strided_slice %5 {offsets = [0, 32], sizes = [16, 16], strides = [1, 1]} : vector<16x96xf32> to vector<16x16xf32>
    %c1_12 = arith.constant 1 : index
    %c0_13 = arith.constant 0 : index
    %c0_14 = arith.constant 0 : index
    %c0_15 = arith.constant 0 : index
    %15 = vector.load %arg4[%c1_12, %c0_13, %c0_14, %c0_15] : memref<3x2x16x16xf32, #tpu.memory_space<vmem>>, vector<1x1x16x16xf32>
    %16 = vector.shape_cast %15 : vector<1x1x16x16xf32> to vector<16x16xf32>
    %17 = vector.shape_cast %14 : vector<16x16xf32> to vector<1x1x16x16xf32>
    tpu.vector_store %arg4[%c1_12, %c0_13, %c0_14, %c0_15], %17 {strides = array<i32>} : memref<3x2x16x16xf32, #tpu.memory_space<vmem>>, vector<1x1x16x16xf32>,
    %18 = vector.extract_strided_slice %5 {offsets = [0, 48], sizes = [16, 16], strides = [1, 1]} : vector<16x96xf32> to vector<16x16xf32>
    %c1_16 = arith.constant 1 : index
    %c1_17 = arith.constant 1 : index
    %c0_18 = arith.constant 0 : index
    %c0_19 = arith.constant 0 : index
    %19 = vector.load %arg4[%c1_16, %c1_17, %c0_18, %c0_19] : memref<3x2x16x16xf32, #tpu.memory_space<vmem>>, vector<1x1x16x16xf32>
    %20 = vector.shape_cast %19 : vector<1x1x16x16xf32> to vector<16x16xf32>
    %21 = vector.shape_cast %18 : vector<16x16xf32> to vector<1x1x16x16xf32>
    tpu.vector_store %arg4[%c1_16, %c1_17, %c0_18, %c0_19], %21 {strides = array<i32>} : memref<3x2x16x16xf32, #tpu.memory_space<vmem>>, vector<1x1x16x16xf32>,
    %22 = vector.extract_strided_slice %5 {offsets = [0, 64], sizes = [16, 16], strides = [1, 1]} : vector<16x96xf32> to vector<16x16xf32>
    %c2 = arith.constant 2 : index
    %c0_20 = arith.constant 0 : index
    %c0_21 = arith.constant 0 : index
    %c0_22 = arith.constant 0 : index
    %23 = vector.load %arg4[%c2, %c0_20, %c0_21, %c0_22] : memref<3x2x16x16xf32, #tpu.memory_space<vmem>>, vector<1x1x16x16xf32>
    %24 = vector.shape_cast %23 : vector<1x1x16x16xf32> to vector<16x16xf32>
    %25 = vector.shape_cast %22 : vector<16x16xf32> to vector<1x1x16x16xf32>
    tpu.vector_store %arg4[%c2, %c0_20, %c0_21, %c0_22], %25 {strides = array<i32>} : memref<3x2x16x16xf32, #tpu.memory_space<vmem>>, vector<1x1x16x16xf32>,
    %26 = vector.extract_strided_slice %5 {offsets = [0, 80], sizes = [16, 16], strides = [1, 1]} : vector<16x96xf32> to vector<16x16xf32>
    %c2_23 = arith.constant 2 : index
    %c1_24 = arith.constant 1 : index
    %c0_25 = arith.constant 0 : index
    %c0_26 = arith.constant 0 : index
    %27 = vector.load %arg4[%c2_23, %c1_24, %c0_25, %c0_26] : memref<3x2x16x16xf32, #tpu.memory_space<vmem>>, vector<1x1x16x16xf32>
    %28 = vector.shape_cast %27 : vector<1x1x16x16xf32> to vector<16x16xf32>
    %29 = vector.shape_cast %26 : vector<16x16xf32> to vector<1x1x16x16xf32>
    tpu.vector_store %arg4[%c2_23, %c1_24, %c0_25, %c0_26], %29 {strides = array<i32>} : memref<3x2x16x16xf32, #tpu.memory_space<vmem>>, vector<1x1x16x16xf32>,
    return
  }
  func.func @transform_0(%arg0: i32) -> (i32, i32) {
    %c0_i32 = arith.constant 0 : i32
    %c0_i32_0 = arith.constant 0 : i32
    return %arg0, %c0_i32 : i32, i32
  }
  func.func @transform_1(%arg0: i32) -> (i32, i32) {
    %c0_i32 = arith.constant 0 : i32
    %c0_i32_0 = arith.constant 0 : i32
    %c0_i32_1 = arith.constant 0 : i32
    return %c0_i32, %c0_i32_0 : i32, i32
  }
  func.func @transform_2(%arg0: i32) -> (i32, i32) {
    %c0_i32 = arith.constant 0 : i32
    %c0_i32_0 = arith.constant 0 : i32
    %c0_i32_1 = arith.constant 0 : i32
    return %c0_i32, %c0_i32_0 : i32, i32
  }
  func.func @transform_3(%arg0: i32) -> (i32, i32, i32, i32) {
    %c0_i32 = arith.constant 0 : i32
    %c0_i32_0 = arith.constant 0 : i32
    %c0_i32_1 = arith.constant 0 : i32
    %c0_i32_2 = arith.constant 0 : i32
    return %c0_i32, %c0_i32_0, %arg0, %c0_i32_1 : i32, i32, i32, i32
  }
}

</mosaic_0001>

<llo_original>
// kernel: tpu_custom_call.1
$region0: #{tpu_custom_call.1}
  #allocation0 [shape = 'u32[]', space=smem, size = 0x4, offset = 0x4, fixed_abs, tag = 'smem constant byte address 0x4 - core index']
  #allocation1 [shape = 'u32[144,128]{1,0:T(1,128)}', space=vmem, size = 0x12000, scoped, tag = 'internal scratch']
  %s0 = inlined_call_operand.hbm [shape: f32[16,32], index: 0, kind: input, shape index: {}]
  %s1 = inlined_call_operand.hbm [shape: f32[32,96], index: 1, kind: input, shape index: {}]
  %s2 = inlined_call_operand.vmem [shape: f32[1,96], index: 2, kind: input, shape index: {}]
  %s3 = inlined_call_operand.hbm [shape: f32[3,2,16,16], index: 3, kind: output, shape index: {}]
  %s4 = sld [smem:[#allocation0]]
  $region30: #{tpu_custom_call.1} parent=0
    _
  %s6 = ssub.s32 1, %s4
  %s7 = scalar_select 0, %s6, %s4
  $region1: #{tpu_custom_call.1} parent=0
    #allocation2 [shape = 'u8[8192]{0}', space=vmem, size = 0x2000, scoped, tag = 'input window, operand 0, single buffered']
    #allocation3 [shape = 's32[1]{0}', space=sflag, size = 0x4, scoped, tag = 'scoped memory for tpu_custom_call.1']
    #allocation4 [shape = 's32[1]{0}', space=sflag, size = 0x4, scoped, tag = 'scoped memory for tpu_custom_call.1']
    #allocation5 [shape = 'u8[16384]{0}', space=vmem, size = 0x4000, scoped, tag = 'input window, operand 1, single buffered']
    #allocation6 [shape = 's32[1]{0}', space=sflag, size = 0x4, scoped, tag = 'scoped memory for tpu_custom_call.1']
    #allocation7 [shape = 'u8[49152]{0}', space=vmem, size = 0xc000, scoped, tag = 'output window, operand 0, single buffered']
    %8 = vsyncpa [#allocation3], 0
    %9 = vsyncpa [#allocation6], 0
    %10 = vsyncpa [#allocation4], 0
    // Predicated region
    $region2: #{tpu_custom_call.1} parent=1 // pred_check
      _
    $region3: #{tpu_custom_call.1} parent=1 // pred_check_branch
      %12 = sbr.rel (0) target = $region5
    $region4: #{tpu_custom_call.1} parent=1 // pred_region
      %s14 = ssub.s32 256, 256
      %15 = vsyncadd [#allocation3], %s14
      %s16 = sshll.u32 [#allocation2], 4
      %s17 = int_to_ptr.vmem [resolvable:$true] %s16
      %22 = dma.hbm_to_vmem [thread:$0]  %s0, 256, %s17, [#allocation3], 128, 128, 8
    $region5: #{tpu_custom_call.1} parent=1 // pred_fallthru
      _
    // Predicated region
    $region6: #{tpu_custom_call.1} parent=1 // pred_check
      _
    $region7: #{tpu_custom_call.1} parent=1 // pred_check_branch
      %24 = sbr.rel (0) target = $region9
    $region8: #{tpu_custom_call.1} parent=1 // pred_region
      %s26 = ssub.s32 512, 512
      %27 = vsyncadd [#allocation6], %s26
      %s28 = sshll.u32 [#allocation5], 4
      %s29 = int_to_ptr.vmem [resolvable:$true] %s28
      %34 = dma.hbm_to_vmem [thread:$0]  %s1, 512, %s29, [#allocation6], 128, 128, 8
    $region9: #{tpu_custom_call.1} parent=1 // pred_fallthru
      _
    // Predicated region
    $region10: #{tpu_custom_call.1} parent=1 // pred_check
      _
    $region11: #{tpu_custom_call.1} parent=1 // pred_check_branch
      %36 = sbr.rel (0) target = $region13
    $region12: #{tpu_custom_call.1} parent=1 // pred_region
      _
    $region13: #{tpu_custom_call.1} parent=1 // pred_fallthru
      _
    // Predicated region
    $region14: #{tpu_custom_call.1} parent=1 // pred_check
      _
    $region15: #{tpu_custom_call.1} parent=1 // pred_check_branch
      %38 = sbr.rel (0) target = $region17
    $region16: #{tpu_custom_call.1} parent=1 // pred_region
      %39 = dma.done [#allocation3], 256
    $region17: #{tpu_custom_call.1} parent=1 // pred_fallthru
      _
    // Predicated region
    $region18: #{tpu_custom_call.1} parent=1 // pred_check
      _
    $region19: #{tpu_custom_call.1} parent=1 // pred_check_branch
      %41 = sbr.rel (0) target = $region21
    $region20: #{tpu_custom_call.1} parent=1 // pred_region
      %42 = dma.done [#allocation6], 512
    $region21: #{tpu_custom_call.1} parent=1 // pred_fallthru
      _
    %v43 = vld [vmem:[#allocation2] sm:$0xff]
    %v44 = vld [vmem:[#allocation2 + $0x8] sm:$0xff]
    %v45 = vld [vmem:[#allocation5] sm:$0xff]
    %v46 = vld [vmem:[#allocation5 + $0x8] sm:$0xff]
    %v47 = vld [vmem:[#allocation5 + $0x10] sm:$0xff]
    %v48 = vld [vmem:[#allocation5 + $0x18] sm:$0xff]
    %v49 = vld [vmem:[%s2] sm:$0x1]
    %v51 = vlaneseq
    %v52 = vshrl.u32 %v51, 7
    %v53 = vsub.s32 0, %v52
    %v54 = vrot.slane %v49, %v53
    %vm56 = vcmask 261120
    %v58 = vsel %vm56, %v43, 0
    %v61 = vsel %vm56, %v44, 0
    %63 = vmatprep.subr.mxu0 0.0
    %64 = vmatpush1.msra.mxu0 0.0
    %65 = vmatprep.subr.mxu0 0.0
    %66 = vmatpush1.msra.mxu0 0.0
    %67 = vmatprep.subr.mxu0 0.0
    %68 = vmatpush1.msra.mxu0 0.0
    %69 = vmatprep.subr.mxu0 0.0
    %70 = vmatpush1.msra.mxu0 0.0
    %71 = vmatprep.subr.mxu0 0.0
    %72 = vmatpush1.msra.mxu0 0.0
    %73 = vmatprep.subr.mxu0 0.0
    %74 = vmatpush1.msra.mxu0 0.0
    %75 = vmatprep.subr.mxu0 0.0
    %76 = vmatpush1.msra.mxu0 0.0
    %77 = vmatprep.subr.mxu0 0.0
    %78 = vmatpush1.msra.mxu0 0.0
    %79 = vmatprep.subr.mxu0 0.0
    %80 = vmatpush1.msra.mxu0 0.0
    %81 = vmatprep.subr.mxu0 0.0
    %82 = vmatpush1.msra.mxu0 0.0
    %83 = vmatprep.subr.mxu0 0.0
    %84 = vmatpush1.msra.mxu0 0.0
    %85 = vmatprep.subr.mxu0 0.0
    %86 = vmatpush1.msra.mxu0 0.0
    %87 = vmatprep.subr.mxu0 0.0
    %88 = vmatpush1.msra.mxu0 %v48
    %89 = vmatprep.subr.mxu0 0.0
    %90 = vmatpush1.msra.mxu0 %v47
    %91 = vmatprep.subr.mxu0 0.0
    %92 = vmatpush1.msra.mxu0 %v46
    %93 = vmatprep.subr.mxu0 0.0
    %94 = vmatpush1.msra.mxu0 %v45
    %95 = vmatprep.subr.mxu0 0.0
    %96 = vmatpush2.msra.mxu0 0.0
    %97 = vmatprep.subr.mxu0 0.0
    %98 = vmatpush2.msra.mxu0 0.0
    %99 = vmatprep.subr.mxu0 0.0
    %100 = vmatpush2.msra.mxu0 0.0
    %101 = vmatprep.subr.mxu0 0.0
    %102 = vmatpush2.msra.mxu0 0.0
    %103 = vmatprep.subr.mxu0 0.0
    %104 = vmatpush2.msra.mxu0 0.0
    %105 = vmatprep.subr.mxu0 0.0
    %106 = vmatpush2.msra.mxu0 0.0
    %107 = vmatprep.subr.mxu0 0.0
    %108 = vmatpush2.msra.mxu0 0.0
    %109 = vmatprep.subr.mxu0 0.0
    %110 = vmatpush2.msra.mxu0 0.0
    %111 = vmatprep.subr.mxu0 0.0
    %112 = vmatpush2.msra.mxu0 0.0
    %113 = vmatprep.subr.mxu0 0.0
    %114 = vmatpush2.msra.mxu0 0.0
    %115 = vmatprep.subr.mxu0 0.0
    %116 = vmatpush2.msra.mxu0 0.0
    %117 = vmatprep.subr.mxu0 0.0
    %118 = vmatpush2.msra.mxu0 0.0
    %119 = vmatprep.subr.mxu0 0.0
    %120 = vmatpush2.msra.mxu0 0.0
    %121 = vmatprep.subr.mxu0 0.0
    %122 = vmatpush2.msra.mxu0 0.0
    %123 = vmatprep.subr.mxu0 0.0
    %124 = vmatpush2.msra.mxu0 0.0
    %125 = vmatprep.subr.mxu0 0.0
    %126 = vmatpush2.msra.mxu0 0.0
    %127 = vmatprep.mubr.f32.mxu0 0.0
    %128 = vmatmul.mubr.f32.gmra.mxu0 %v58
    %v129 = vpop.f32.mrf.mxu0
    %v130 = vadd.f32 %v54, %v129
    %v131 = vpop.f32.mrf.mxu0
    %132 = vmatprep.mubr.f32.mxu0 0.0
    %133 = vmatmul.mubr.f32.gmra.mxu0 %v61
    %v134 = vpop.f32.mrf.mxu0
    %v135 = vadd.f32 %v54, %v134
    %v136 = vpop.f32.mrf.mxu0
    %137 = vdwg.mxu0
    %vm138 = vcmask 130048
    %139 = vst.msk [vmem:[#allocation7] sm:$0xff] %vm138, %v130
    %140 = vst.msk [vmem:[#allocation7 + $0x8] sm:$0xff] %vm138, %v135
    %143 = vrot.lane.b32.xlu0 %v130, 112
    %v144 = vpop.permute.xlu0 %143
    %145 = vrot.lane.b32.xlu0 %v135, 112
    %v146 = vpop.permute.xlu0 %145
    %s149 = scalar_lea.vmem [#allocation7], 16
    %150 = vst.msk [vmem:[%s149] sm:$0xff] %vm138, %v144
    %151 = vst.msk [vmem:[%s149 + $0x8] sm:$0xff] %vm138, %v146
    %152 = vrot.lane.b32.xlu0 %v130, 96
    %v153 = vpop.permute.xlu0 %152
    %154 = vrot.lane.b32.xlu0 %v135, 96
    %v155 = vpop.permute.xlu0 %154
    %s158 = scalar_lea.vmem [#allocation7], 32
    %159 = vst.msk [vmem:[%s158] sm:$0xff] %vm138, %v153
    %160 = vst.msk [vmem:[%s158 + $0x8] sm:$0xff] %vm138, %v155
    %161 = vrot.lane.b32.xlu0 %v130, 80
    %v162 = vpop.permute.xlu0 %161
    %163 = vrot.lane.b32.xlu0 %v135, 80
    %v164 = vpop.permute.xlu0 %163
    %s167 = scalar_lea.vmem [#allocation7], 48
    %168 = vst.msk [vmem:[%s167] sm:$0xff] %vm138, %v162
    %169 = vst.msk [vmem:[%s167 + $0x8] sm:$0xff] %vm138, %v164
    %170 = vrot.lane.b32.xlu0 %v130, 64
    %v171 = vpop.permute.xlu0 %170
    %172 = vrot.lane.b32.xlu0 %v135, 64
    %v173 = vpop.permute.xlu0 %172
    %s176 = scalar_lea.vmem [#allocation7], 64
    %177 = vst.msk [vmem:[%s176] sm:$0xff] %vm138, %v171
    %178 = vst.msk [vmem:[%s176 + $0x8] sm:$0xff] %vm138, %v173
    %179 = vrot.lane.b32.xlu0 %v130, 48
    %v180 = vpop.permute.xlu0 %179
    %181 = vrot.lane.b32.xlu0 %v135, 48
    %v182 = vpop.permute.xlu0 %181
    %s185 = scalar_lea.vmem [#allocation7], 80
    %186 = vst.msk [vmem:[%s185] sm:$0xff] %vm138, %v180
    %187 = vst.msk [vmem:[%s185 + $0x8] sm:$0xff] %vm138, %v182
    // Predicated region
    $region22: #{tpu_custom_call.1} parent=1 // pred_check
      _
    $region23: #{tpu_custom_call.1} parent=1 // pred_check_branch
      %189 = sbr.rel (0) target = $region25
    $region24: #{tpu_custom_call.1} parent=1 // pred_region
      %s191 = ssub.s32 1536, 1536
      %192 = vsyncadd [#allocation4], %s191
      %s193 = sshll.u32 [#allocation7], 4
      %s194 = int_to_ptr.vmem [resolvable:$true] %s193
      %199 = dma.vmem_to_hbm [thread:$0]  %s194, 1536, %s3, [#allocation4], 128, 128, 8
    $region25: #{tpu_custom_call.1} parent=1 // pred_fallthru
      _
    // Predicated region
    $region26: #{tpu_custom_call.1} parent=1 // pred_check
      _
    $region27: #{tpu_custom_call.1} parent=1 // pred_check_branch
      %201 = sbr.rel (0) target = $region29
    $region28: #{tpu_custom_call.1} parent=1 // pred_region
      %202 = dma.done [#allocation4], 1536
    $region29: #{tpu_custom_call.1} parent=1 // pred_fallthru
      _
    %203 = vsyncpa [#allocation3], 1
    %204 = vsyncpa [#allocation6], 1
    %205 = vsyncpa [#allocation4], 1

</llo_original>
